<compile_context>
chip_gen: v6e
topology: v6e:2x2x1
jax: 0.10.0
libtpu: 0.0.40
codegen_flags: <defaults>
</compile_context>

<pallas_src>
import jax
import jax.numpy as jnp
from jax.experimental import pallas as pl
from jax.experimental.pallas import tpu as pltpu


# ---------------------------------------------------------------------------
# Pallas kernel: fused matmul + bias add (the nn.Linear of PatchEmbedding)
# ---------------------------------------------------------------------------
def _linear_kernel(x_ref, w_ref, b_ref, o_ref):
    # x_ref : (TM, F)  bf16 patch-row tile
    # w_ref : (F,  E)  bf16 projection weight (resident across all row tiles)
    # b_ref : (1,  E)  f32  bias (resident)
    # o_ref : (TM, E)  out_dtype output tile
    acc = jnp.dot(x_ref[...], w_ref[...], preferred_element_type=jnp.float32)
    o_ref[...] = (acc + b_ref[...]).astype(o_ref.dtype)


def _pick_tm(M, tm_req, min_tiles=2):
    """Row-tile size: multiple of 8, <= tm_req, and (when M is big enough)
    small enough that the row grid has >= min_tiles tiles so both v7x
    TensorCores get work."""
    cap = (M // min_tiles) // 8 * 8
    if cap >= 8:
        return max(8, min(tm_req, cap))
    # Tiny M: a single full-extent row block (always a legal sublane shape).
    return M


def _linear_pallas(x2d_bf16, w_t_bf16, bias_2d, tm, out_dtype):
    M, F = x2d_bf16.shape
    _, E = w_t_bf16.shape
    n_m = pl.cdiv(M, tm)
    out_bytes = jnp.dtype(out_dtype).itemsize

    cost = pl.CostEstimate(
        flops=2 * M * F * E,
        transcendentals=0,
        bytes_accessed=M * F * 2 + F * E * 2 + E * 4 + M * E * out_bytes,
    )

    # Each BlockSpec gets a double buffer; size the scoped-VMEM limit from the
    # real footprint (plus margin for Mosaic internal scratch), clamped to a
    # range that is safe on all generations (v7x has 64 MiB physical VMEM).
    vmem_needed = 2 * (tm * F * 2 + F * E * 2 + E * 4 + tm * E * out_bytes)
    vmem_limit = int(min(max(vmem_needed * 3 // 2, 16 * 1024 * 1024),
                         56 * 1024 * 1024))

    return pl.pallas_call(
        _linear_kernel,
        out_shape=jax.ShapeDtypeStruct((M, E), out_dtype),
        grid_spec=pltpu.PrefetchScalarGridSpec(
            num_scalar_prefetch=0,
            grid=(n_m,),
            in_specs=[
                pl.BlockSpec((tm, F), lambda i: (i, 0)),  # activation row tile
                pl.BlockSpec((F, E), lambda i: (0, 0)),   # weight, resident
                pl.BlockSpec((1, E), lambda i: (0, 0)),   # bias, resident
            ],
            out_specs=pl.BlockSpec((tm, E), lambda i: (i, 0)),
        ),
        compiler_params=pltpu.CompilerParams(
            dimension_semantics=("parallel",),
            vmem_limit_bytes=vmem_limit),
        cost_estimate=cost,
    )(x2d_bf16, w_t_bf16, bias_2d)


# ---------------------------------------------------------------------------
# PatchEmbedding forward
# ---------------------------------------------------------------------------
def patch_embedding_forward(x, weight, bias, patch_size, tm=1024,
                            out_dtype=jnp.bfloat16):
    """x: (B, C, H, W) float32.  weight: (embed_dim, C*p*p) like nn.Linear.
    Returns (B, n_patches, embed_dim) in out_dtype (default bf16; pass
    jnp.float32 to match PyTorch's output dtype exactly)."""
    B, C, H, W = x.shape
    p = patch_size
    assert H % p == 0 and W % p == 0, "Image size must be divisible by the patch size."
    Hp, Wp = H // p, W // p
    n_patches = Hp * Wp
    F_ = C * p * p
    E = weight.shape[0]
    M = B * n_patches

    # Layout glue replicating torch unfold(2,p,p).unfold(3,p,p) -> view ->
    # permute -> view.  Feature order per patch vector is [channel, row, col].
    # Cast to bf16 *before* the transpose so the materialized shuffle moves
    # 2-byte elements (half the HBM traffic of doing it in f32).
    xb = x.astype(jnp.bfloat16)
    patches = xb.reshape(B, C, Hp, p, Wp, p)
    patches = jnp.transpose(patches, (0, 2, 4, 1, 3, 5))        # (B,Hp,Wp,C,p,p)
    x2d = patches.reshape(M, F_)                                # (M, C*p*p)

    # No padding: F and E are used as full-extent block dims (legal even when
    # not multiples of 128); the M tail, if any, is a partial last block whose
    # out-of-bounds rows are never written back.  E being a multiple of 128
    # (typical ViT embed dims) keeps the output stores lane-dense.
    TM = _pick_tm(M, tm)

    w_t = weight.T.astype(jnp.bfloat16)                         # (F, E)
    bias_2d = bias.reshape(1, E).astype(jnp.float32)

    out2d = _linear_pallas(x2d, w_t, bias_2d, TM, out_dtype)    # (M, E) exact
    return out2d.reshape(B, n_patches, E)


# ---------------------------------------------------------------------------
# Demo / self-test
# ---------------------------------------------------------------------------
if __name__ == "__main__":
    # Small shapes consistent with the module's forward.
    B, C, H, W = 2, 4, 16, 16
    patch_size = 4
    embed_dim = 128
    feat_dim = C * patch_size * patch_size       # 64
    n_patches = (H // patch_size) ** 2           # 16

    key = jax.random.PRNGKey(0)
    kx, kw, kb = jax.random.split(key, 3)

    x = jax.random.normal(kx, (B, C, H, W), dtype=jnp.float32)
    # Deterministic nn.Linear-style init (uniform in +-1/sqrt(fan_in)).
    bound = 1.0 / (feat_dim ** 0.5)
    weight = jax.random.uniform(kw, (embed_dim, feat_dim), jnp.float32, -bound, bound)
    bias = jax.random.uniform(kb, (embed_dim,), jnp.float32, -bound, bound)

    fwd = jax.jit(patch_embedding_forward,
                  static_argnames=("patch_size", "tm", "out_dtype"))
    out = fwd(x, weight, bias, patch_size=patch_size)
    out = jax.block_until_ready(out)
    assert out.shape == (B, n_patches, embed_dim), out.shape
    assert out.dtype == jnp.bfloat16, out.dtype

    # Pure-JAX f32 reference of the full forward semantics.
    # Tolerance reflects bf16 MXU operands / bf16 output with f32 accumulation.
    patches_ref = x.reshape(B, C, H // patch_size, patch_size,
                            W // patch_size, patch_size)
    patches_ref = jnp.transpose(patches_ref, (0, 2, 4, 1, 3, 5)).reshape(
        B, n_patches, feat_dim)
    ref = patches_ref @ weight.T + bias
    out_f32 = out.astype(jnp.float32)
    max_err = float(jnp.max(jnp.abs(out_f32 - ref)))
    assert jnp.allclose(out_f32, ref, atol=3e-2, rtol=3e-2), max_err

    print("KERNEL_OK")
</pallas_src>

<mosaic_0001>
module attributes {stable_mosaic.version = 11 : i64} {
  func.func @_linear_kernel(%arg0: i32, %arg1: memref<16x64xbf16, #tpu.memory_space<vmem>>, %arg2: memref<64x128xbf16, #tpu.memory_space<vmem>>, %arg3: memref<1x128xf32, #tpu.memory_space<vmem>>, %arg4: memref<16x128xbf16, #tpu.memory_space<vmem>>) attributes {dimension_semantics = [#tpu.dimension_semantics<parallel>], iteration_bounds = array<i64: 2>, scalar_prefetch = 0 : i64, scratch_operands = 0 : i64, tpu.core_type = #tpu.core_type<tc>, window_params = [{transform_indices = @transform_0, window_bounds = array<i64: 16, 64>}, {pipeline_mode = #tpu.pipeline_mode<synchronous>, transform_indices = @transform_1, window_bounds = array<i64: 64, 128>}, {pipeline_mode = #tpu.pipeline_mode<synchronous>, transform_indices = @transform_2, window_bounds = array<i64: 1, 128>}, {transform_indices = @transform_3, window_bounds = array<i64: 16, 128>}]} {
    %c0 = arith.constant 0 : index
    %c0_0 = arith.constant 0 : index
    %0 = vector.load %arg1[%c0, %c0_0] : memref<16x64xbf16, #tpu.memory_space<vmem>>, vector<16x64xbf16>
    %c0_1 = arith.constant 0 : index
    %c0_2 = arith.constant 0 : index
    %1 = vector.load %arg2[%c0_1, %c0_2] : memref<64x128xbf16, #tpu.memory_space<vmem>>, vector<64x128xbf16>
    %cst = arith.constant dense<0.000000e+00> : vector<16x128xf32>
    %2 = tpu.matmul %0, %1, %cst {dimension_numbers = #tpu.dot_dimension_numbers<[1], [0], [0], [1], [0, 0, 1, 1], [], []>} : vector<16x64xbf16>, vector<64x128xbf16>, vector<16x128xf32> -> vector<16x128xf32>
    %c0_3 = arith.constant 0 : index
    %c0_4 = arith.constant 0 : index
    %3 = vector.load %arg3[%c0_3, %c0_4] : memref<1x128xf32, #tpu.memory_space<vmem>>, vector<1x128xf32>
    %4 = vector.broadcast %3 : vector<1x128xf32> to vector<16x128xf32>
    %5 = arith.addf %2, %4 : vector<16x128xf32>
    %6 = arith.truncf %5 : vector<16x128xf32> to vector<16x128xbf16>
    %c0_5 = arith.constant 0 : index
    %c0_6 = arith.constant 0 : index
    %7 = vector.load %arg4[%c0_5, %c0_6] : memref<16x128xbf16, #tpu.memory_space<vmem>>, vector<16x128xbf16>
    tpu.vector_store %arg4[%c0_5, %c0_6], %6 {strides = array<i32>} : memref<16x128xbf16, #tpu.memory_space<vmem>>, vector<16x128xbf16>,
    return
  }
  func.func @transform_0(%arg0: i32) -> (i32, i32) {
    %c0_i32 = arith.constant 0 : i32
    %c0_i32_0 = arith.constant 0 : i32
    return %arg0, %c0_i32 : i32, i32
  }
  func.func @transform_1(%arg0: i32) -> (i32, i32) {
    %c0_i32 = arith.constant 0 : i32
    %c0_i32_0 = arith.constant 0 : i32
    %c0_i32_1 = arith.constant 0 : i32
    return %c0_i32, %c0_i32_0 : i32, i32
  }
  func.func @transform_2(%arg0: i32) -> (i32, i32) {
    %c0_i32 = arith.constant 0 : i32
    %c0_i32_0 = arith.constant 0 : i32
    %c0_i32_1 = arith.constant 0 : i32
    return %c0_i32, %c0_i32_0 : i32, i32
  }
  func.func @transform_3(%arg0: i32) -> (i32, i32) {
    %c0_i32 = arith.constant 0 : i32
    %c0_i32_0 = arith.constant 0 : i32
    return %arg0, %c0_i32 : i32, i32
  }
}

</mosaic_0001>

<llo_original>
// kernel: patch_embedding_forward.1
$region0: #{patch_embedding_forward.1}
  #allocation0 [shape = 'u32[]', space=smem, size = 0x4, offset = 0x4, fixed_abs, tag = 'smem constant byte address 0x4 - core index']
  #allocation1 [shape = 'u32[144,128]{1,0:T(1,128)}', space=vmem, size = 0x12000, scoped, tag = 'internal scratch']
  %s0 = inlined_call_operand.vmem [shape: bf16[32,64], index: 0, kind: input, shape index: {}]
  %s1 = inlined_call_operand.vmem [shape: bf16[64,128], index: 1, kind: input, shape index: {}]
  %s2 = inlined_call_operand.vmem [shape: f32[1,128], index: 2, kind: input, shape index: {}]
  %s3 = inlined_call_operand.hbm [shape: bf16[32,128], index: 3, kind: output, shape index: {}]
  %s4 = sld [smem:[#allocation0]]
  $region45: #{patch_embedding_forward.1} parent=0
    _
  %s6 = ssub.s32 1, %s4
  %s7 = scalar_select 0, %s6, %s4
  $region1: #{patch_embedding_forward.1} parent=0
    #allocation2 [shape = 'u8[8192]{0}', space=vmem, size = 0x2000, scoped, tag = 'output window, operand 0']
    #allocation3 [shape = 's32[2]{0}', space=sflag, size = 0x8, scoped, tag = 'scoped memory for patch_embedding_forward.1']
    %8 = vsyncpa [#allocation3], 0
    %s9 = scalar_lea.sflag [#allocation3], 1
    %10 = vsyncpa %s9, 0
    loop: start=0, step=1, limit=4
    $region2: #{patch_embedding_forward.1} parent=1 // loop_pre_header
      _
    $region3: #{patch_embedding_forward.1} parent=1 // loop_header
      %s12 = sphi 0, %s16
      %p13 = scmp.ge.s32.totalorder %s12, 4
      %s22 = sphi 0, %s24
      %s25 = sphi 0, %s22
      %s26 = sphi 0, %s25
      %s42 = sphi 0, %s26
      %s46 = sphi 0, %s46
      %s48 = sphi 0, %s46
      %s49 = sphi 0, %s48
      %s63 = sphi 0, %s49
      %s67 = sphi 0, %s67
      %s69 = sphi 0, %s67
      %s70 = sphi 0, %s69
      %s84 = sphi 0, %s70
      %s90 = sphi 0, %s92
      %s93 = sphi 0, %s90
      %s94 = sphi 0, %s93
      %s110 = sphi 0, %s94
    $region4: #{patch_embedding_forward.1} parent=1 // loop_header_branch
      %15 = sbr.rel (%p13) target = $region8
    $region5: #{patch_embedding_forward.1} parent=1 // loop_body
      %s17 = ssub.s32 %s12, 1
      %s18 = ssub.s32 %s12, 2
      %s19 = sadd.s32 %s12, 1
      %s20 = ssub.s32 %s12, %s19
      %p21 = scmp.eq.s32.totalorder %s20, 0
      %s23 = sadd.s32 %s22, 1
      %s24 = scalar_select %p21, %s22, %s23
      %p27 = pneg %p21
      %p28 = scmp.eq.s32.totalorder %s12, 1
      %p29 = por %p27, %p28
      %p30 = scmp.ne.s32.totalorder %s22, %s25
      %p31 = scmp.eq.s32.totalorder %s12, 0
      %p32 = por %p30, %p31
      %p33 = scmp.ne.s32.totalorder %s22, %s25
      %p34 = scmp.eq.s32.totalorder %s17, 1
      %p35 = por %p33, %p34
      %p36 = scmp.ne.s32.totalorder %s25, %s26
      %p37 = scmp.eq.s32.totalorder %s17, 0
      %p38 = por %p36, %p37
      %p39 = scmp.ne.s32.totalorder %s25, %s26
      %p40 = scmp.eq.s32.totalorder %s18, 1
      %p41 = por %p39, %p40
      %p43 = scmp.ne.s32.totalorder %s26, %s42
      %p44 = scmp.eq.s32.totalorder %s18, 0
      %p45 = por %p43, %p44
      %s47 = sadd.s32 %s46, 1
      %p50 = scmp.eq.s32.totalorder %s12, 1
      %p51 = scmp.ne.s32.totalorder %s46, %s48
      %p52 = scmp.eq.s32.totalorder %s12, 0
      %p53 = por %p51, %p52
      %p54 = scmp.ne.s32.totalorder %s46, %s48
      %p55 = scmp.eq.s32.totalorder %s17, 1
      %p56 = por %p54, %p55
      %p57 = scmp.ne.s32.totalorder %s48, %s49
      %p58 = scmp.eq.s32.totalorder %s17, 0
      %p59 = por %p57, %p58
      %p60 = scmp.ne.s32.totalorder %s48, %s49
      %p61 = scmp.eq.s32.totalorder %s18, 1
      %p62 = por %p60, %p61
      %p64 = scmp.ne.s32.totalorder %s49, %s63
      %p65 = scmp.eq.s32.totalorder %s18, 0
      %p66 = por %p64, %p65
      %s68 = sadd.s32 %s67, 1
      %p71 = scmp.eq.s32.totalorder %s12, 1
      %p72 = scmp.ne.s32.totalorder %s67, %s69
      %p73 = scmp.eq.s32.totalorder %s12, 0
      %p74 = por %p72, %p73
      %p75 = scmp.ne.s32.totalorder %s67, %s69
      %p76 = scmp.eq.s32.totalorder %s17, 1
      %p77 = por %p75, %p76
      %p78 = scmp.ne.s32.totalorder %s69, %s70
      %p79 = scmp.eq.s32.totalorder %s17, 0
      %p80 = por %p78, %p79
      %p81 = scmp.ne.s32.totalorder %s69, %s70
      %p82 = scmp.eq.s32.totalorder %s18, 1
      %p83 = por %p81, %p82
      %p85 = scmp.ne.s32.totalorder %s70, %s84
      %p86 = scmp.eq.s32.totalorder %s18, 0
      %p87 = por %p85, %p86
      %s88 = ssub.s32 %s12, %s19
      %p89 = scmp.eq.s32.totalorder %s88, 0
      %s91 = sadd.s32 %s90, 1
      %s92 = scalar_select %p89, %s90, %s91
      %p95 = pneg %p89
      %p96 = scmp.eq.s32.totalorder %s12, 1
      %p97 = por %p95, %p96
      %p98 = scmp.ne.s32.totalorder %s90, %s93
      %p99 = scmp.eq.s32.totalorder %s12, 0
      %p100 = por %p98, %p99
      %p101 = scmp.ne.s32.totalorder %s90, %s93
      %p102 = scmp.eq.s32.totalorder %s17, 1
      %p103 = por %p101, %p102
      %p104 = scmp.ne.s32.totalorder %s93, %s94
      %p105 = scmp.eq.s32.totalorder %s17, 0
      %p106 = por %p104, %p105
      %p107 = scmp.ne.s32.totalorder %s93, %s94
      %p108 = scmp.eq.s32.totalorder %s18, 1
      %p109 = por %p107, %p108
      %p111 = scmp.ne.s32.totalorder %s94, %s110
      %p112 = scmp.eq.s32.totalorder %s18, 0
      %p113 = por %p111, %p112
      %p114 = scmp.le.s32.totalorder 1, %s12
      %p115 = scmp.lt.s32.totalorder %s12, 3
      %p116 = pnand %p114, %p115
      %p117 = pneg %p116
      // Predicated region
      $region9: #{patch_embedding_forward.1} parent=5 // pred_check
        _
      $region10: #{patch_embedding_forward.1} parent=5 // pred_check_branch
        %119 = sbr.rel (%p116) target = $region12
      $region11: #{patch_embedding_forward.1} parent=5 // pred_region
        %s120 = ssub.s32 %s12, 1
        // Predicated region
        $region13: #{patch_embedding_forward.1} parent=11 // pred_check
          %p121 = pneg %p59
        $region14: #{patch_embedding_forward.1} parent=11 // pred_check_branch
          %123 = sbr.rel (%p121) target = $region16
        $region15: #{patch_embedding_forward.1} parent=11 // pred_region
          _
        $region16: #{patch_embedding_forward.1} parent=11 // pred_fallthru
          _
        // Predicated region
        $region17: #{patch_embedding_forward.1} parent=11 // pred_check
          %p124 = pneg %p80
        $region18: #{patch_embedding_forward.1} parent=11 // pred_check_branch
          %126 = sbr.rel (%p124) target = $region20
        $region19: #{patch_embedding_forward.1} parent=11 // pred_region
          _
        $region20: #{patch_embedding_forward.1} parent=11 // pred_fallthru
          _
      $region12: #{patch_embedding_forward.1} parent=5 // pred_fallthru
        _
      %p127 = scmp.lt.s32.totalorder %s12, 2
      // Predicated region
      $region21: #{patch_embedding_forward.1} parent=5 // pred_check
        %p128 = pneg %p127
      $region22: #{patch_embedding_forward.1} parent=5 // pred_check_branch
        %130 = sbr.rel (%p128) target = $region24
      $region23: #{patch_embedding_forward.1} parent=5 // pred_region
        // Predicated region
        $region25: #{patch_embedding_forward.1} parent=23 // pred_check
          %p131 = pneg %p32
        $region26: #{patch_embedding_forward.1} parent=23 // pred_check_branch
          %133 = sbr.rel (%p131) target = $region28
        $region27: #{patch_embedding_forward.1} parent=23 // pred_region
          %s134 = smul.u32 2, %s12
          %p135 = scmp.lt.s32.totalorder %s134, 3
          %s136 = scalar_select %p135, %s134, 3
          %s137 = smul.addr %s136, 4
          %s138 = scalar_lea.vmem %s0, %s137
          %s139 = smul.u32 2, %s12
        $region28: #{patch_embedding_forward.1} parent=23 // pred_fallthru
          _
      $region24: #{patch_embedding_forward.1} parent=5 // pred_fallthru
        _
      %p140 = scmp.le.s32.totalorder 1, %s12
      %p141 = scmp.lt.s32.totalorder %s12, 3
      %p142 = pnand %p140, %p141
      %p143 = pneg %p142
      // Predicated region
      $region29: #{patch_embedding_forward.1} parent=5 // pred_check
        _
      $region30: #{patch_embedding_forward.1} parent=5 // pred_check_branch
        %145 = sbr.rel (%p142) target = $region32
      $region31: #{patch_embedding_forward.1} parent=5 // pred_region
        %s146 = ssub.s32 %s12, 1
        %s147 = smul.u32 2, %s17
        %p148 = scmp.lt.s32.totalorder %s147, 3
        %s149 = scalar_select %p148, %s147, 3
        %s150 = smul.addr %s149, 4
        %s151 = scalar_lea.vmem %s0, %s150
        %p152 = pneg %p38
        %p153 = pneg %p35
        %p154 = pneg %p59
        %p155 = pneg %p56
        %p156 = pneg %p80
        %p157 = pneg %p77
        %p158 = pneg %p106
        %p159 = pneg %p103
        %s160 = sand.u32 %s93, 1
        %s161 = scalar_lea.sflag [#allocation3], %s160
        %s162 = sand.u32 %s93, 1
        %s163 = smul.addr %s162, 8
        %s164 = scalar_lea.vmem [#allocation2], %s163
        %s165 = smul.u32 2, %s17
        %p166 = scmp.lt.s32.totalorder %s165, 3
        %s167 = scalar_select %p166, %s165, 3
        %s168 = smul.addr %s167, 4
        %s169 = scalar_lea.vmem %s0, %s168
        %s170 = smul.u32 2, %s17
        %s171 = smul.u32 2, %s17
        %v173 = vld [vmem:[%s169] sm:$0xf]
        %v174 = vld [vmem:[%s169 + $0x4] sm:$0xf]
        %v175 = vld [vmem:[%s1] sm:$0xf]
        %v176 = vld [vmem:[%s1 + $0x4] sm:$0xf]
        %v177 = vld [vmem:[%s1 + $0x8] sm:$0xf]
        %v178 = vld [vmem:[%s1 + $0xc] sm:$0xf]
        %v179 = vld [vmem:[%s1 + $0x10] sm:$0xf]
        %v180 = vld [vmem:[%s1 + $0x14] sm:$0xf]
        %v181 = vld [vmem:[%s1 + $0x18] sm:$0xf]
        %v182 = vld [vmem:[%s1 + $0x1c] sm:$0xf]
        %v183 = vld [vmem:[%s2] sm:$0x1]
        %v185 = vlaneseq
        %v186 = vshrl.u32 %v185, 7
        %v187 = vsub.s32 0, %v186
        %v188 = vrot.slane %v183, %v187
        %v192 = vunpack.c.l.b16 %v173
        %v193 = vunpack.c.l.b16 %v174
        %v194 = vpack.c.b16 %v193, %v192
        %v203 = vunpack.c.l.b16 %v175
        %v204 = vunpack.c.l.b16 %v176
        %v205 = vunpack.c.l.b16 %v177
        %v206 = vunpack.c.l.b16 %v178
        %v207 = vunpack.c.l.b16 %v179
        %v208 = vunpack.c.l.b16 %v180
        %v209 = vunpack.c.l.b16 %v181
        %v210 = vunpack.c.l.b16 %v182
        %v211 = vpack.c.b16 %v204, %v203
        %v212 = vpack.c.b16 %v206, %v205
        %v213 = vpack.c.b16 %v208, %v207
        %v214 = vpack.c.b16 %v210, %v209
        %vm219 = vcmask 523264
        %v221 = vsel %vm219, %v194, 0
        %223 = vmatprep.subr.bf16.mxu0 0
        %224 = vmatpush1.bf16.msra.mxu0 0
        %225 = vmatprep.subr.bf16.mxu0 0
        %226 = vmatpush1.bf16.msra.mxu0 0
        %227 = vmatprep.subr.bf16.mxu0 0
        %228 = vmatpush1.bf16.msra.mxu0 0
        %229 = vmatprep.subr.bf16.mxu0 0
        %230 = vmatpush1.bf16.msra.mxu0 0
        %231 = vmatprep.subr.bf16.mxu0 0
        %232 = vmatpush1.bf16.msra.mxu0 %v214
        %233 = vmatprep.subr.bf16.mxu0 0
        %234 = vmatpush1.bf16.msra.mxu0 %v213
        %235 = vmatprep.subr.bf16.mxu0 0
        %236 = vmatpush1.bf16.msra.mxu0 %v212
        %237 = vmatprep.subr.bf16.mxu0 0
        %238 = vmatpush1.bf16.msra.mxu0 %v211
        %239 = vmatprep.subr.bf16.mxu0 0
        %240 = vmatpush2.bf16.msra.mxu0 0
        %241 = vmatprep.subr.bf16.mxu0 0
        %242 = vmatpush2.bf16.msra.mxu0 0
        %243 = vmatprep.subr.bf16.mxu0 0
        %244 = vmatpush2.bf16.msra.mxu0 0
        %245 = vmatprep.subr.bf16.mxu0 0
        %246 = vmatpush2.bf16.msra.mxu0 0
        %247 = vmatprep.subr.bf16.mxu0 0
        %248 = vmatpush2.bf16.msra.mxu0 0
        %249 = vmatprep.subr.bf16.mxu0 0
        %250 = vmatpush2.bf16.msra.mxu0 0
        %251 = vmatprep.subr.bf16.mxu0 0
        %252 = vmatpush2.bf16.msra.mxu0 0
        %253 = vmatprep.subr.bf16.mxu0 0
        %254 = vmatpush2.bf16.msra.mxu0 0
        %255 = vmatprep.mubr.bf16.mxu0 0
        %256 = vmatmul.mubr.bf16.gmra.mxu0 %v221
        %v257 = vpop.f32.mrf.mxu0
        %v258 = vadd.f32 %v188, %v257
        %v259 = vpop.f32.mrf.mxu0
        %v260 = vpop.f32.mrf.mxu0
        %v261 = vadd.f32 %v188, %v260
        %v262 = vpop.f32.mrf.mxu0
        %263 = vdwg.mxu0
        %v264 = vpack.c.bf16 %v261, %v258
        %v266 = vunpack.c.l.b16 %v264
        %v267 = vunpack.c.h.b16 %v264
        %v268 = vpack.c.b16 %v266, %v266
        %v269 = vpack.c.b16 %v267, %v267
        %272 = vst [vmem:[%s164] sm:$0xf] %v268
        %273 = vst [vmem:[%s164 + $0x4] sm:$0xf] %v269
        %s274 = sand.u32 %s93, 1
        %s275 = scalar_lea.sflag [#allocation3], %s274
        %s276 = sand.u32 %s93, 1
        %s277 = smul.addr %s276, 8
        %s278 = scalar_lea.vmem [#allocation2], %s277
        // Predicated region
        $region33: #{patch_embedding_forward.1} parent=31 // pred_check
          %p279 = pneg %p103
        $region34: #{patch_embedding_forward.1} parent=31 // pred_check_branch
          %281 = sbr.rel (%p279) target = $region36
        $region35: #{patch_embedding_forward.1} parent=31 // pred_region
          %s282 = smul.u32 2, %s17
          %s284 = ssub.s32 128, 128
          %285 = vsyncadd %s275, %s284
          %s286 = smul.addr %s282, 64
          %s287 = scalar_lea.hbm %s3, %s286
          %s288 = sshll.u32 %s278, 4
          %s289 = int_to_ptr.vmem [resolvable:$true] %s288
          %294 = dma.vmem_to_hbm [thread:$0]  %s289, 128, %s287, %s275, 64, 64, 4
        $region36: #{patch_embedding_forward.1} parent=31 // pred_fallthru
          _
      $region32: #{patch_embedding_forward.1} parent=5 // pred_fallthru
        _
      %p295 = scmp.le.s32.totalorder 2, %s12
      // Predicated region
      $region37: #{patch_embedding_forward.1} parent=5 // pred_check
        %p296 = pneg %p295
      $region38: #{patch_embedding_forward.1} parent=5 // pred_check_branch
        %298 = sbr.rel (%p296) target = $region40
      $region39: #{patch_embedding_forward.1} parent=5 // pred_region
        %s299 = ssub.s32 %s12, 2
        // Predicated region
        $region41: #{patch_embedding_forward.1} parent=39 // pred_check
          %p300 = pneg %p109
        $region42: #{patch_embedding_forward.1} parent=39 // pred_check_branch
          %302 = sbr.rel (%p300) target = $region44
        $region43: #{patch_embedding_forward.1} parent=39 // pred_region
          %s303 = sand.u32 %s94, 1
          %s304 = scalar_lea.sflag [#allocation3], %s303
          %s305 = sand.u32 %s94, 1
          %s306 = smul.addr %s305, 8
          %s307 = scalar_lea.vmem [#allocation2], %s306
          %308 = dma.done %s304, 128
        $region44: #{patch_embedding_forward.1} parent=39 // pred_fallthru
          _
      $region40: #{patch_embedding_forward.1} parent=5 // pred_fallthru
        _
    $region6: #{patch_embedding_forward.1} parent=1 // loop_footer
      %s16 = sadd.s32 1, %s12
    $region7: #{patch_embedding_forward.1} parent=1 // loop_footer_branch
      %11 = sbr.rel target = $region3
    $region8: #{patch_embedding_forward.1} parent=1 // loop_exit
      _
    %309 = vsyncpa [#allocation3], 1
    %s310 = scalar_lea.sflag [#allocation3], 1
    %311 = vsyncpa %s310, 1

</llo_original>
